<compile_context>
chip_gen: v7x
topology: tpu7x:2x2x1
jax: 0.10.0
libtpu: 0.0.40
codegen_flags: <defaults>
</compile_context>

<pallas_src>
import functools

import numpy as np
import jax
import jax.numpy as jnp
from jax.experimental import pallas as pl
from jax.experimental.pallas import tpu as pltpu


def _convt_bn_act_kernel(x_ref, w_ref, shift_ref, o_ref, acc_ref, *,
                         apply_relu, compute_dtype):
    # x_ref:     (tk, tl)    activation tile (input dtype; cast to bf16 here)
    # w_ref:     (ncol, tk)  scale-folded weights, row order (co, kh, kw)
    # shift_ref: (ncol, 1)   f32 per-(co,kh,kw) shift (folded BN shift / bias)
    # o_ref:     (ncol, tl)  output tile (lane dim = spatial positions, dense)
    # acc_ref:   (ncol, tl)  f32 accumulator scratch across the K (C_in) axis
    ki = pl.program_id(2)

    @pl.when(ki == 0)
    def _init():
        acc_ref[...] = jnp.zeros_like(acc_ref)

    x = x_ref[...].astype(compute_dtype)
    acc_ref[...] += jnp.dot(w_ref[...], x, preferred_element_type=jnp.float32)

    @pl.when(ki == pl.num_programs(2) - 1)
    def _finalize():
        y = acc_ref[...] + shift_ref[...]
        if apply_relu:
            y = jnp.maximum(y, 0.0)
        o_ref[...] = y.astype(o_ref.dtype)


def _vmem_budget_bytes():
    """Returns (per-step tile budget, vmem_limit_bytes) for the local TPU generation."""
    try:
        phys = pltpu.get_tpu_info().vmem_capacity_bytes
    except Exception:
        phys = 64 * 1024 * 1024                     # conservative (v7x-sized) fallback
    if phys >= 128 * 1024 * 1024:                   # v5e / v6e: 128 MiB per core
        return 72 * 1024 * 1024, 100 * 1024 * 1024
    return 36 * 1024 * 1024, 48 * 1024 * 1024       # v7x: 64 MiB per core


def conv_transpose_bn_act(x, weight, scale, shift, *, kernel_size, stride,
                          has_act=True, out_dtype=None,
                          compute_dtype=jnp.bfloat16):
    """x: [N, C_in, H, W]; weight: [C_in, C_out, k, k] (PyTorch ConvTranspose2d layout).
    scale/shift: per-output-channel affine (BN folded, or identity/bias)."""
    assert kernel_size == stride, "only non-overlapping deconv (k == stride) supported"
    N, C_in, H, W = x.shape
    k = kernel_size
    C_out = weight.shape[1]
    ncol = C_out * k * k
    L = H * W
    out_dtype = x.dtype if out_dtype is None else out_dtype

    # ---- operands (glue; in a jitted model these reshapes are free bitcasts) ----
    x3 = x.reshape(N, C_in, L)                              # NCHW buffer, as-is
    scale_col = jnp.repeat(scale.astype(jnp.float32), k * k)
    shift_col = jnp.repeat(shift.astype(jnp.float32), k * k)
    w2 = jnp.transpose(weight.astype(jnp.float32), (1, 2, 3, 0)).reshape(ncol, C_in)
    w2 = (w2 * scale_col[:, None]).astype(compute_dtype)    # tiny one-time fold
    shift2 = shift_col[:, None]                              # (ncol, 1) f32

    # ---- K (C_in) tiling: keep the resident weight tile modest ------------------
    # TODO(synk): only power-of-two K splits; odd C_in factors fall back to full K.
    wd = jnp.dtype(compute_dtype).itemsize
    tk = C_in
    while 2 * ncol * tk * wd > (4 << 20) and tk % 16 == 0:
        tk //= 2
    grid_k = C_in // tk

    # ---- lane (spatial) tiling under a generation-aware VMEM budget -------------
    budget, vmem_limit = _vmem_budget_bytes()
    xd = jnp.dtype(x.dtype).itemsize
    od = jnp.dtype(out_dtype).itemsize
    resident = 2 * ncol * tk * wd + ncol * 4                 # weight bufs + shift
    per_lane = 2 * tk * xd + 2 * ncol * od + ncol * 4        # x + out (dbl buf) + acc
    tl = max(128, (budget - resident) // per_lane)
    if tl >= L:
        tl = L
    else:
        tl = (tl // 128) * 128
    # Megacore: keep a handful of parallel grid steps on big problems (v7x has two
    # TensorCores), but never shrink below 1024 lanes (roofline already ~86% there).
    while N * pl.cdiv(L, tl) < 8 and tl >= 2048:
        tl = max(1024, ((tl // 2) // 128) * 128)
    grid_l = pl.cdiv(L, tl)     # ragged last tile: lanes are independent, so the
                                # garbage padding only feeds masked-out outputs

    kernel = functools.partial(_convt_bn_act_kernel, apply_relu=has_act,
                               compute_dtype=compute_dtype)

    def run(single_buffer_invariants):
        def inv(shape, index_map, invariant):
            if invariant and single_buffer_invariants:
                return pl.BlockSpec(shape, index_map, pipeline_mode=pl.Buffered(1))
            return pl.BlockSpec(shape, index_map)

        grid_spec = pltpu.PrefetchScalarGridSpec(
            num_scalar_prefetch=0,
            grid=(N, grid_l, grid_k),
            in_specs=[
                pl.BlockSpec((None, tk, tl), lambda n, li, ki: (n, ki, li)),
                inv((ncol, tk), lambda n, li, ki: (0, ki), invariant=(grid_k == 1)),
                inv((ncol, 1), lambda n, li, ki: (0, 0), invariant=True),
            ],
            out_specs=pl.BlockSpec((None, ncol, tl), lambda n, li, ki: (n, 0, li)),
            scratch_shapes=[pltpu.VMEM((ncol, tl), jnp.float32)],
        )
        return pl.pallas_call(
            kernel,
            out_shape=jax.ShapeDtypeStruct((N, ncol, L), out_dtype),
            grid_spec=grid_spec,
            compiler_params=pltpu.CompilerParams(
                dimension_semantics=("parallel", "parallel", "arbitrary"),
                vmem_limit_bytes=vmem_limit),
        )(x3, w2, shift2)

    try:
        out_gemm = run(True)
    except Exception:     # single-buffer pipeline_mode unsupported -> default buffering
        out_gemm = run(False)

    # ---- back to NCHW ------------------------------------------------------------
    # (N, ncol, L) == (N, C_out, k, k, H, W). The transpose below is the single
    # remaining HBM pass inherent to PyTorch's NCHW output layout (w/kw lane
    # interleave cannot come out of one GEMM); both reshapes are free bitcasts.
    # TODO(synk): expose the (N, C_out*k*k, H*W) kernel layout for NHWC consumers
    # to drop this transpose entirely.
    if k == 1:
        return out_gemm.reshape(N, C_out, H, W)
    out6 = out_gemm.reshape(N, C_out, k, k, H, W)
    out6 = jnp.transpose(out6, (0, 1, 4, 2, 5, 3))          # (N, C_out, H, k, W, k)
    return out6.reshape(N, C_out, H * k, W * k)


class ConvTransposeBnActBlock:
    """Pallas port of the PyTorch module (deterministic synthetic params)."""

    def __init__(self, inplanes, planes, kernel_size, stride, groups=1,
                 has_bn=True, has_act=True, key=None):
        # TODO(synk): grouped ConvTranspose2d (groups > 1) not implemented.
        assert groups == 1
        # TODO(synk): overlapping deconv (kernel_size != stride) not implemented.
        assert kernel_size == stride
        self.kernel_size = kernel_size
        self.stride = stride
        self.has_act = has_act
        key = jax.random.PRNGKey(0) if key is None else key
        kw, kb, kg, kbe, km, kv = jax.random.split(key, 6)
        # PyTorch ConvTranspose2d weight shape: [in, out, kH, kW]
        self.weight = 0.1 * jax.random.normal(
            kw, (inplanes, planes, kernel_size, kernel_size), jnp.float32)
        eps = 1e-5
        if has_bn:
            # TODO(synk): BatchNorm2d applied in inference (eval) mode with running
            # statistics; training-mode batch stats not computed.
            gamma = 1.0 + 0.1 * jax.random.normal(kg, (planes,), jnp.float32)
            beta = 0.1 * jax.random.normal(kbe, (planes,), jnp.float32)
            running_mean = 0.1 * jax.random.normal(km, (planes,), jnp.float32)
            running_var = jax.random.uniform(kv, (planes,), jnp.float32, 0.5, 1.5)
            self.scale = gamma / jnp.sqrt(running_var + eps)
            self.shift = beta - running_mean * self.scale
        else:
            bias = 0.1 * jax.random.normal(kb, (planes,), jnp.float32)
            self.scale = jnp.ones((planes,), jnp.float32)
            self.shift = bias

    def __call__(self, x):
        return conv_transpose_bn_act(
            x, self.weight, self.scale, self.shift,
            kernel_size=self.kernel_size, stride=self.stride,
            has_act=self.has_act)


if __name__ == "__main__":
    N, C_in, H, W = 2, 4, 16, 16
    C_out, ksize, stride = 8, 2, 2

    root = jax.random.PRNGKey(0)
    k_x, k_p = jax.random.split(root)
    x = jax.random.normal(k_x, (N, C_in, H, W), jnp.float32)

    block = ConvTransposeBnActBlock(C_in, C_out, kernel_size=ksize, stride=stride,
                                    groups=1, has_bn=True, has_act=True, key=k_p)

    out = jax.block_until_ready(block(x))
    assert out.shape == (N, C_out, H * stride, W * stride)

    # Reference: direct ConvTranspose2d (k == stride, pad 0) with the same bf16
    # quantization of inputs / scale-folded weights as the kernel, f32 accumulate,
    # then "+ shift" (folded BN) + ReLU.
    w_eff = block.weight * block.scale[None, :, None, None]
    x_q = x.astype(jnp.bfloat16).astype(jnp.float32)
    w_q = w_eff.astype(jnp.bfloat16).astype(jnp.float32)
    y = jnp.einsum("nchw,cokl->nohwkl", x_q, w_q,
                   precision=jax.lax.Precision.HIGHEST)
    ref = jnp.transpose(y, (0, 1, 2, 4, 3, 5)).reshape(N, C_out, H * ksize, W * ksize)
    ref = ref + block.shift[None, :, None, None]
    ref = jnp.maximum(ref, 0.0)

    np.testing.assert_allclose(np.asarray(out), np.asarray(ref), rtol=1e-4, atol=1e-4)
    print("KERNEL_OK")
</pallas_src>

<mosaic_0001>
module attributes {stable_mosaic.version = 11 : i64} {
  func.func @_convt_bn_act_kernel(%arg0: i32, %arg1: i32, %arg2: i32, %arg3: memref<1x4x256xf32, #tpu.memory_space<vmem>>, %arg4: memref<32x4xbf16, #tpu.memory_space<vmem>>, %arg5: memref<32x1xf32, #tpu.memory_space<vmem>>, %arg6: memref<1x32x256xf32, #tpu.memory_space<vmem>>, %arg7: memref<32x256xf32, #tpu.memory_space<vmem>>) attributes {dimension_semantics = [#tpu.dimension_semantics<parallel>, #tpu.dimension_semantics<parallel>, #tpu.dimension_semantics<arbitrary>], iteration_bounds = array<i64: 2, 1, 1>, scalar_prefetch = 0 : i64, scratch_operands = 1 : i64, tpu.core_type = #tpu.core_type<tc>, window_params = [{transform_indices = @transform_0, window_bounds = array<i64: 1, 4, 256>}, {pipeline_mode = #tpu.pipeline_mode<synchronous>, transform_indices = @transform_1, window_bounds = array<i64: 32, 4>}, {pipeline_mode = #tpu.pipeline_mode<synchronous>, transform_indices = @transform_2, window_bounds = array<i64: 32, 1>}, {transform_indices = @transform_3, window_bounds = array<i64: 1, 32, 256>}]} {
    %c0_i32 = arith.constant 0 : i32
    %0 = arith.cmpi eq, %arg2, %c0_i32 : i32
    %1 = arith.extui %0 : i1 to i32
    %c0_i32_0 = arith.constant 0 : i32
    %2 = arith.cmpi ne, %1, %c0_i32_0 : i32
    scf.if %2 {
      %cst_11 = arith.constant 0.000000e+00 : f32
      %14 = vector.broadcast %cst_11 : f32 to vector<32x256xf32>
      %c0_12 = arith.constant 0 : index
      %c0_13 = arith.constant 0 : index
      %15 = vector.load %arg7[%c0_12, %c0_13] : memref<32x256xf32, #tpu.memory_space<vmem>>, vector<32x256xf32>
      tpu.vector_store %arg7[%c0_12, %c0_13], %14 {strides = array<i32>} : memref<32x256xf32, #tpu.memory_space<vmem>>, vector<32x256xf32>,
    } else {
    }
    %c0 = arith.constant 0 : index
    %c0_1 = arith.constant 0 : index
    %c0_2 = arith.constant 0 : index
    %3 = vector.load %arg3[%c0, %c0_1, %c0_2] : memref<1x4x256xf32, #tpu.memory_space<vmem>>, vector<1x4x256xf32>
    %4 = vector.shape_cast %3 : vector<1x4x256xf32> to vector<4x256xf32>
    %5 = arith.truncf %4 : vector<4x256xf32> to vector<4x256xbf16>
    %c0_3 = arith.constant 0 : index
    %c0_4 = arith.constant 0 : index
    %6 = vector.load %arg7[%c0_3, %c0_4] : memref<32x256xf32, #tpu.memory_space<vmem>>, vector<32x256xf32>
    %c0_5 = arith.constant 0 : index
    %c0_6 = arith.constant 0 : index
    %7 = vector.load %arg4[%c0_5, %c0_6] : memref<32x4xbf16, #tpu.memory_space<vmem>>, vector<32x4xbf16>
    %cst = arith.constant dense<0.000000e+00> : vector<32x256xf32>
    %8 = tpu.matmul %7, %5, %cst {dimension_numbers = #tpu.dot_dimension_numbers<[1], [0], [0], [1], [0, 0, 1, 1], [], []>} : vector<32x4xbf16>, vector<4x256xbf16>, vector<32x256xf32> -> vector<32x256xf32>
    %9 = arith.addf %6, %8 : vector<32x256xf32>
    %c0_7 = arith.constant 0 : index
    %c0_8 = arith.constant 0 : index
    %10 = vector.load %arg7[%c0_7, %c0_8] : memref<32x256xf32, #tpu.memory_space<vmem>>, vector<32x256xf32>
    tpu.vector_store %arg7[%c0_7, %c0_8], %9 {strides = array<i32>} : memref<32x256xf32, #tpu.memory_space<vmem>>, vector<32x256xf32>,
    %c0_i32_9 = arith.constant 0 : i32
    %11 = arith.cmpi eq, %arg2, %c0_i32_9 : i32
    %12 = arith.extui %11 : i1 to i32
    %c0_i32_10 = arith.constant 0 : i32
    %13 = arith.cmpi ne, %12, %c0_i32_10 : i32
    scf.if %13 {
      %c0_11 = arith.constant 0 : index
      %c0_12 = arith.constant 0 : index
      %14 = vector.load %arg7[%c0_11, %c0_12] : memref<32x256xf32, #tpu.memory_space<vmem>>, vector<32x256xf32>
      %c0_13 = arith.constant 0 : index
      %c0_14 = arith.constant 0 : index
      %15 = vector.load %arg5[%c0_13, %c0_14] : memref<32x1xf32, #tpu.memory_space<vmem>>, vector<32x1xf32>
      %16 = vector.broadcast %15 : vector<32x1xf32> to vector<32x256xf32>
      %17 = arith.addf %14, %16 : vector<32x256xf32>
      %cst_15 = arith.constant 0.000000e+00 : f32
      %18 = vector.broadcast %cst_15 : f32 to vector<32x256xf32>
      %19 = arith.maximumf %17, %18 : vector<32x256xf32>
      %c0_16 = arith.constant 0 : index
      %c0_17 = arith.constant 0 : index
      %c0_18 = arith.constant 0 : index
      %20 = vector.load %arg6[%c0_16, %c0_17, %c0_18] : memref<1x32x256xf32, #tpu.memory_space<vmem>>, vector<1x32x256xf32>
      %21 = vector.shape_cast %20 : vector<1x32x256xf32> to vector<32x256xf32>
      %22 = vector.shape_cast %19 : vector<32x256xf32> to vector<1x32x256xf32>
      tpu.vector_store %arg6[%c0_16, %c0_17, %c0_18], %22 {strides = array<i32>} : memref<1x32x256xf32, #tpu.memory_space<vmem>>, vector<1x32x256xf32>,
    } else {
    }
    return
  }
  func.func @transform_0(%arg0: i32, %arg1: i32, %arg2: i32) -> (i32, i32, i32) {
    %c0_i32 = arith.constant 0 : i32
    return %arg0, %arg2, %arg1 : i32, i32, i32
  }
  func.func @transform_1(%arg0: i32, %arg1: i32, %arg2: i32) -> (i32, i32) {
    %c0_i32 = arith.constant 0 : i32
    %c0_i32_0 = arith.constant 0 : i32
    return %c0_i32, %arg2 : i32, i32
  }
  func.func @transform_2(%arg0: i32, %arg1: i32, %arg2: i32) -> (i32, i32) {
    %c0_i32 = arith.constant 0 : i32
    %c0_i32_0 = arith.constant 0 : i32
    %c0_i32_1 = arith.constant 0 : i32
    return %c0_i32, %c0_i32_0 : i32, i32
  }
  func.func @transform_3(%arg0: i32, %arg1: i32, %arg2: i32) -> (i32, i32, i32) {
    %c0_i32 = arith.constant 0 : i32
    %c0_i32_0 = arith.constant 0 : i32
    return %arg0, %c0_i32, %arg1 : i32, i32, i32
  }
}

module attributes {stable_mosaic.version = 11 : i64} {
  func.func @_convt_bn_act_kernel(%arg0: i32, %arg1: i32, %arg2: i32, %arg3: memref<1x4x256xf32, #tpu.memory_space<vmem>>, %arg4: memref<32x4xbf16, #tpu.memory_space<vmem>>, %arg5: memref<32x1xf32, #tpu.memory_space<vmem>>, %arg6: memref<1x32x256xf32, #tpu.memory_space<vmem>>, %arg7: memref<32x256xf32, #tpu.memory_space<vmem>>) attributes {dimension_semantics = [#tpu.dimension_semantics<parallel>, #tpu.dimension_semantics<parallel>, #tpu.dimension_semantics<arbitrary>], iteration_bounds = array<i64: 2, 1, 1>, scalar_prefetch = 0 : i64, scratch_operands = 1 : i64, tpu.core_type = #tpu.core_type<tc>, window_params = [{transform_indices = @transform_0, window_bounds = array<i64: 1, 4, 256>}, {transform_indices = @transform_1, window_bounds = array<i64: 32, 4>}, {pipeline_mode = #tpu.pipeline_mode<synchronous>, transform_indices = @transform_2, window_bounds = array<i64: 32, 1>}, {transform_indices = @transform_3, window_bounds = array<i64: 1, 32, 256>}]} {
    %c0_i32 = arith.constant 0 : i32
    %0 = arith.cmpi eq, %arg2, %c0_i32 : i32
    %1 = arith.extui %0 : i1 to i32
    %c0_i32_0 = arith.constant 0 : i32
    %2 = arith.cmpi ne, %1, %c0_i32_0 : i32
    scf.if %2 {
      %cst_11 = arith.constant 0.000000e+00 : f32
      %14 = vector.broadcast %cst_11 : f32 to vector<32x256xf32>
      %c0_12 = arith.constant 0 : index
      %c0_13 = arith.constant 0 : index
      %15 = vector.load %arg7[%c0_12, %c0_13] : memref<32x256xf32, #tpu.memory_space<vmem>>, vector<32x256xf32>
      tpu.vector_store %arg7[%c0_12, %c0_13], %14 {strides = array<i32>} : memref<32x256xf32, #tpu.memory_space<vmem>>, vector<32x256xf32>,
    } else {
    }
    %c0 = arith.constant 0 : index
    %c0_1 = arith.constant 0 : index
    %c0_2 = arith.constant 0 : index
    %3 = vector.load %arg3[%c0, %c0_1, %c0_2] : memref<1x4x256xf32, #tpu.memory_space<vmem>>, vector<1x4x256xf32>
    %4 = vector.shape_cast %3 : vector<1x4x256xf32> to vector<4x256xf32>
    %5 = arith.truncf %4 : vector<4x256xf32> to vector<4x256xbf16>
    %c0_3 = arith.constant 0 : index
    %c0_4 = arith.constant 0 : index
    %6 = vector.load %arg7[%c0_3, %c0_4] : memref<32x256xf32, #tpu.memory_space<vmem>>, vector<32x256xf32>
    %c0_5 = arith.constant 0 : index
    %c0_6 = arith.constant 0 : index
    %7 = vector.load %arg4[%c0_5, %c0_6] : memref<32x4xbf16, #tpu.memory_space<vmem>>, vector<32x4xbf16>
    %cst = arith.constant dense<0.000000e+00> : vector<32x256xf32>
    %8 = tpu.matmul %7, %5, %cst {dimension_numbers = #tpu.dot_dimension_numbers<[1], [0], [0], [1], [0, 0, 1, 1], [], []>} : vector<32x4xbf16>, vector<4x256xbf16>, vector<32x256xf32> -> vector<32x256xf32>
    %9 = arith.addf %6, %8 : vector<32x256xf32>
    %c0_7 = arith.constant 0 : index
    %c0_8 = arith.constant 0 : index
    %10 = vector.load %arg7[%c0_7, %c0_8] : memref<32x256xf32, #tpu.memory_space<vmem>>, vector<32x256xf32>
    tpu.vector_store %arg7[%c0_7, %c0_8], %9 {strides = array<i32>} : memref<32x256xf32, #tpu.memory_space<vmem>>, vector<32x256xf32>,
    %c0_i32_9 = arith.constant 0 : i32
    %11 = arith.cmpi eq, %arg2, %c0_i32_9 : i32
    %12 = arith.extui %11 : i1 to i32
    %c0_i32_10 = arith.constant 0 : i32
    %13 = arith.cmpi ne, %12, %c0_i32_10 : i32
    scf.if %13 {
      %c0_11 = arith.constant 0 : index
      %c0_12 = arith.constant 0 : index
      %14 = vector.load %arg7[%c0_11, %c0_12] : memref<32x256xf32, #tpu.memory_space<vmem>>, vector<32x256xf32>
      %c0_13 = arith.constant 0 : index
      %c0_14 = arith.constant 0 : index
      %15 = vector.load %arg5[%c0_13, %c0_14] : memref<32x1xf32, #tpu.memory_space<vmem>>, vector<32x1xf32>
      %16 = vector.broadcast %15 : vector<32x1xf32> to vector<32x256xf32>
      %17 = arith.addf %14, %16 : vector<32x256xf32>
      %cst_15 = arith.constant 0.000000e+00 : f32
      %18 = vector.broadcast %cst_15 : f32 to vector<32x256xf32>
      %19 = arith.maximumf %17, %18 : vector<32x256xf32>
      %c0_16 = arith.constant 0 : index
      %c0_17 = arith.constant 0 : index
      %c0_18 = arith.constant 0 : index
      %20 = vector.load %arg6[%c0_16, %c0_17, %c0_18] : memref<1x32x256xf32, #tpu.memory_space<vmem>>, vector<1x32x256xf32>
      %21 = vector.shape_cast %20 : vector<1x32x256xf32> to vector<32x256xf32>
      %22 = vector.shape_cast %19 : vector<32x256xf32> to vector<1x32x256xf32>
      tpu.vector_store %arg6[%c0_16, %c0_17, %c0_18], %22 {strides = array<i32>} : memref<1x32x256xf32, #tpu.memory_space<vmem>>, vector<1x32x256xf32>,
    } else {
    }
    return
  }
  func.func @transform_0(%arg0: i32, %arg1: i32, %arg2: i32) -> (i32, i32, i32) {
    %c0_i32 = arith.constant 0 : i32
    return %arg0, %arg2, %arg1 : i32, i32, i32
  }
  func.func @transform_1(%arg0: i32, %arg1: i32, %arg2: i32) -> (i32, i32) {
    %c0_i32 = arith.constant 0 : i32
    %c0_i32_0 = arith.constant 0 : i32
    return %c0_i32, %arg2 : i32, i32
  }
  func.func @transform_2(%arg0: i32, %arg1: i32, %arg2: i32) -> (i32, i32) {
    %c0_i32 = arith.constant 0 : i32
    %c0_i32_0 = arith.constant 0 : i32
    %c0_i32_1 = arith.constant 0 : i32
    return %c0_i32, %c0_i32_0 : i32, i32
  }
  func.func @transform_3(%arg0: i32, %arg1: i32, %arg2: i32) -> (i32, i32, i32) {
    %c0_i32 = arith.constant 0 : i32
    %c0_i32_0 = arith.constant 0 : i32
    return %arg0, %c0_i32, %arg1 : i32, i32, i32
  }
}

</mosaic_0001>

<llo_original>
// kernel: tpu_custom_call.1
$region0: #{tpu_custom_call.1}
  #allocation0 [shape = 'u32[]', space=smem, size = 0x4, offset = 0x4, fixed_abs, tag = 'smem constant byte address 0x4 - core index']
  #allocation1 [shape = 'u32[144,128]{1,0:T(1,128)}', space=vmem, size = 0x12000, scoped, tag = 'internal scratch']
  #allocation2 [shape = 'f32[32,256]{1,0:T(8,128)}', space=vmem, size = 0x8000, scoped, tag = 'scratch operand']
  %s0 = inlined_call_operand.vmem [shape: f32[2,4,256], index: 0, kind: input, shape index: {}]
  %s1 = inlined_call_operand.vmem [shape: bf16[32,4], index: 1, kind: input, shape index: {}]
  %s2 = inlined_call_operand.vmem [shape: f32[32,1], index: 2, kind: input, shape index: {}]
  %s3 = inlined_call_operand.hbm [shape: f32[2,32,256], index: 3, kind: output, shape index: {}]
  %s4 = sld [smem:[#allocation0]]
  $region53: #{tpu_custom_call.1} parent=0
    _
  %s6 = ssub.s32 1, %s4
  %s7 = scalar_select 0, %s6, %s4
  $region1: #{tpu_custom_call.1} parent=0
    #allocation3 [shape = 'u8[65536]{0}', space=vmem, size = 0x10000, scoped, tag = 'output window, operand 0']
    #allocation4 [shape = 's32[2]{0}', space=sflag, size = 0x8, scoped, tag = 'scoped memory for tpu_custom_call.1']
    %8 = vsyncpa [#allocation4], 0
    %s9 = scalar_lea.sflag [#allocation4], 1
    %10 = vsyncpa %s9, 0
    loop: start=0, step=1, limit=4
    $region2: #{tpu_custom_call.1} parent=1 // loop_pre_header
      _
    $region3: #{tpu_custom_call.1} parent=1 // loop_header
      %s12 = sphi 0, %s16
      %p13 = scmp.ge.s32.totalorder %s12, 4
      %s19 = sphi 0, %s38
      %s20 = sphi 0, %s34
      %s21 = sphi 0, %s30
      %s22 = sphi 0, %s19
      %s23 = sphi 0, %s20
      %s24 = sphi 0, %s21
      %s25 = sphi 0, %s22
      %s26 = sphi 0, %s23
      %s27 = sphi 0, %s24
      %s45 = sphi 0, %s47
      %s48 = sphi 0, %s45
      %s49 = sphi 0, %s48
      %s65 = sphi 0, %s49
      %s71 = sphi 0, %s73
      %s74 = sphi 0, %s71
      %s75 = sphi 0, %s74
      %s91 = sphi 0, %s75
      %s95 = sphi 0, %s95
      %s97 = sphi 0, %s95
      %s98 = sphi 0, %s97
      %s112 = sphi 0, %s98
      %s120 = sphi 0, %s122
      %s123 = sphi 0, %s120
      %s124 = sphi 0, %s123
      %s140 = sphi 0, %s124
    $region4: #{tpu_custom_call.1} parent=1 // loop_header_branch
      %15 = sbr.rel (%p13) target = $region8
    $region5: #{tpu_custom_call.1} parent=1 // loop_body
      %s17 = ssub.s32 %s12, 1
      %s18 = ssub.s32 %s12, 2
      %s28 = sadd.s32 1, %s21
      %p29 = scmp.ge.s32.totalorder %s28, 1
      %s30 = scalar_select %p29, 0, %s28
      %s31 = sadd.s32 1, %s20
      %s32 = scalar_select %p29, %s31, %s20
      %p33 = scmp.ge.s32.totalorder %s32, 1
      %s34 = scalar_select %p33, 0, %s32
      %s35 = sadd.s32 1, %s19
      %s36 = scalar_select %p33, %s35, %s19
      %p37 = scmp.ge.s32.totalorder %s36, 2
      %s38 = scalar_select %p37, 0, %s36
      %s39 = ssub.s32 %s19, %s38
      %s40 = ssub.s32 %s21, %s30
      %s41 = sor.u32 %s39, %s40
      %s42 = ssub.s32 %s20, %s34
      %s43 = sor.u32 %s41, %s42
      %p44 = scmp.eq.s32.totalorder %s43, 0
      %s46 = sadd.s32 %s45, 1
      %s47 = scalar_select %p44, %s45, %s46
      %p50 = pneg %p44
      %p51 = scmp.eq.s32.totalorder %s12, 1
      %p52 = por %p50, %p51
      %p53 = scmp.ne.s32.totalorder %s45, %s48
      %p54 = scmp.eq.s32.totalorder %s12, 0
      %p55 = por %p53, %p54
      %p56 = scmp.ne.s32.totalorder %s45, %s48
      %p57 = scmp.eq.s32.totalorder %s17, 1
      %p58 = por %p56, %p57
      %p59 = scmp.ne.s32.totalorder %s48, %s49
      %p60 = scmp.eq.s32.totalorder %s17, 0
      %p61 = por %p59, %p60
      %p62 = scmp.ne.s32.totalorder %s48, %s49
      %p63 = scmp.eq.s32.totalorder %s18, 1
      %p64 = por %p62, %p63
      %p66 = scmp.ne.s32.totalorder %s49, %s65
      %p67 = scmp.eq.s32.totalorder %s18, 0
      %p68 = por %p66, %p67
      %s69 = ssub.s32 %s21, %s30
      %p70 = scmp.eq.s32.totalorder %s69, 0
      %s72 = sadd.s32 %s71, 1
      %s73 = scalar_select %p70, %s71, %s72
      %p76 = pneg %p70
      %p77 = scmp.eq.s32.totalorder %s12, 1
      %p78 = por %p76, %p77
      %p79 = scmp.ne.s32.totalorder %s71, %s74
      %p80 = scmp.eq.s32.totalorder %s12, 0
      %p81 = por %p79, %p80
      %p82 = scmp.ne.s32.totalorder %s71, %s74
      %p83 = scmp.eq.s32.totalorder %s17, 1
      %p84 = por %p82, %p83
      %p85 = scmp.ne.s32.totalorder %s74, %s75
      %p86 = scmp.eq.s32.totalorder %s17, 0
      %p87 = por %p85, %p86
      %p88 = scmp.ne.s32.totalorder %s74, %s75
      %p89 = scmp.eq.s32.totalorder %s18, 1
      %p90 = por %p88, %p89
      %p92 = scmp.ne.s32.totalorder %s75, %s91
      %p93 = scmp.eq.s32.totalorder %s18, 0
      %p94 = por %p92, %p93
      %s96 = sadd.s32 %s95, 1
      %p99 = scmp.eq.s32.totalorder %s12, 1
      %p100 = scmp.ne.s32.totalorder %s95, %s97
      %p101 = scmp.eq.s32.totalorder %s12, 0
      %p102 = por %p100, %p101
      %p103 = scmp.ne.s32.totalorder %s95, %s97
      %p104 = scmp.eq.s32.totalorder %s17, 1
      %p105 = por %p103, %p104
      %p106 = scmp.ne.s32.totalorder %s97, %s98
      %p107 = scmp.eq.s32.totalorder %s17, 0
      %p108 = por %p106, %p107
      %p109 = scmp.ne.s32.totalorder %s97, %s98
      %p110 = scmp.eq.s32.totalorder %s18, 1
      %p111 = por %p109, %p110
      %p113 = scmp.ne.s32.totalorder %s98, %s112
      %p114 = scmp.eq.s32.totalorder %s18, 0
      %p115 = por %p113, %p114
      %s116 = ssub.s32 %s19, %s38
      %s117 = ssub.s32 %s20, %s34
      %s118 = sor.u32 %s116, %s117
      %p119 = scmp.eq.s32.totalorder %s118, 0
      %s121 = sadd.s32 %s120, 1
      %s122 = scalar_select %p119, %s120, %s121
      %p125 = pneg %p119
      %p126 = scmp.eq.s32.totalorder %s12, 1
      %p127 = por %p125, %p126
      %p128 = scmp.ne.s32.totalorder %s120, %s123
      %p129 = scmp.eq.s32.totalorder %s12, 0
      %p130 = por %p128, %p129
      %p131 = scmp.ne.s32.totalorder %s120, %s123
      %p132 = scmp.eq.s32.totalorder %s17, 1
      %p133 = por %p131, %p132
      %p134 = scmp.ne.s32.totalorder %s123, %s124
      %p135 = scmp.eq.s32.totalorder %s17, 0
      %p136 = por %p134, %p135
      %p137 = scmp.ne.s32.totalorder %s123, %s124
      %p138 = scmp.eq.s32.totalorder %s18, 1
      %p139 = por %p137, %p138
      %p141 = scmp.ne.s32.totalorder %s124, %s140
      %p142 = scmp.eq.s32.totalorder %s18, 0
      %p143 = por %p141, %p142
      %p144 = scmp.le.s32.totalorder 1, %s12
      %p145 = scmp.lt.s32.totalorder %s12, 3
      %p146 = pnand %p144, %p145
      %p147 = pneg %p146
      // Predicated region
      $region9: #{tpu_custom_call.1} parent=5 // pred_check
        _
      $region10: #{tpu_custom_call.1} parent=5 // pred_check_branch
        %149 = sbr.rel (%p146) target = $region12
      $region11: #{tpu_custom_call.1} parent=5 // pred_region
        %s150 = ssub.s32 %s12, 1
        // Predicated region
        $region13: #{tpu_custom_call.1} parent=11 // pred_check
          %p151 = pneg %p87
        $region14: #{tpu_custom_call.1} parent=11 // pred_check_branch
          %153 = sbr.rel (%p151) target = $region16
        $region15: #{tpu_custom_call.1} parent=11 // pred_region
          %p154 = scmp.lt.s32.totalorder %s24, 0
          %s155 = scalar_select %p154, %s24, 0
          %s156 = smul.addr %s155, 4
          %s157 = scalar_lea.vmem %s1, %s156
        $region16: #{tpu_custom_call.1} parent=11 // pred_fallthru
          _
        // Predicated region
        $region17: #{tpu_custom_call.1} parent=11 // pred_check
          %p158 = pneg %p108
        $region18: #{tpu_custom_call.1} parent=11 // pred_check_branch
          %160 = sbr.rel (%p158) target = $region20
        $region19: #{tpu_custom_call.1} parent=11 // pred_region
          _
        $region20: #{tpu_custom_call.1} parent=11 // pred_fallthru
          _
      $region12: #{tpu_custom_call.1} parent=5 // pred_fallthru
        _
      %p161 = scmp.lt.s32.totalorder %s12, 2
      // Predicated region
      $region21: #{tpu_custom_call.1} parent=5 // pred_check
        %p162 = pneg %p161
      $region22: #{tpu_custom_call.1} parent=5 // pred_check_branch
        %164 = sbr.rel (%p162) target = $region24
      $region23: #{tpu_custom_call.1} parent=5 // pred_region
        // Predicated region
        $region25: #{tpu_custom_call.1} parent=23 // pred_check
          %p165 = pneg %p55
        $region26: #{tpu_custom_call.1} parent=23 // pred_check_branch
          %167 = sbr.rel (%p165) target = $region28
        $region27: #{tpu_custom_call.1} parent=23 // pred_region
          %s168 = smul.u32 2, %s20
          %p169 = scmp.lt.s32.totalorder %s19, 1
          %s170 = scalar_select %p169, %s19, 1
          %p171 = scmp.lt.s32.totalorder %s21, 0
          %s172 = scalar_select %p171, %s21, 0
          %p173 = scmp.lt.s32.totalorder %s168, 1
          %s174 = scalar_select %p173, %s168, 1
          %s175 = smul.addr %s172, 2
          %s176 = sadd.s32 %s174, %s175
          %s177 = smul.addr %s170, 2
          %s178 = sadd.s32 %s176, %s177
          %s179 = smul.addr %s178, 4
          %s180 = scalar_lea.vmem %s0, %s179
          %s181 = smul.u32 2, %s20
        $region28: #{tpu_custom_call.1} parent=23 // pred_fallthru
          _
      $region24: #{tpu_custom_call.1} parent=5 // pred_fallthru
        _
      %p182 = scmp.le.s32.totalorder 1, %s12
      %p183 = scmp.lt.s32.totalorder %s12, 3
      %p184 = pnand %p182, %p183
      %p185 = pneg %p184
      // Predicated region
      $region29: #{tpu_custom_call.1} parent=5 // pred_check
        _
      $region30: #{tpu_custom_call.1} parent=5 // pred_check_branch
        %187 = sbr.rel (%p184) target = $region32
      $region31: #{tpu_custom_call.1} parent=5 // pred_region
        %s188 = ssub.s32 %s12, 1
        %s189 = smul.u32 2, %s23
        %p190 = scmp.lt.s32.totalorder %s22, 1
        %s191 = scalar_select %p190, %s22, 1
        %p192 = scmp.lt.s32.totalorder %s24, 0
        %s193 = scalar_select %p192, %s24, 0
        %p194 = scmp.lt.s32.totalorder %s189, 1
        %s195 = scalar_select %p194, %s189, 1
        %s196 = smul.addr %s193, 2
        %s197 = sadd.s32 %s195, %s196
        %s198 = smul.addr %s191, 2
        %s199 = sadd.s32 %s197, %s198
        %s200 = smul.addr %s199, 4
        %s201 = scalar_lea.vmem %s0, %s200
        %p202 = pneg %p61
        %p203 = pneg %p58
        %p204 = scmp.lt.s32.totalorder %s24, 0
        %s205 = scalar_select %p204, %s24, 0
        %s206 = smul.addr %s205, 4
        %s207 = scalar_lea.vmem %s1, %s206
        %p208 = pneg %p87
        %p209 = pneg %p84
        %p210 = pneg %p108
        %p211 = pneg %p105
        %p212 = pneg %p136
        %p213 = pneg %p133
        %s214 = sand.u32 %s123, 1
        %s215 = scalar_lea.sflag [#allocation4], %s214
        %s216 = sand.u32 %s123, 1
        %s217 = smul.addr %s216, 64
        %s218 = scalar_lea.vmem [#allocation3], %s217
        %s219 = smul.u32 2, %s23
        %p220 = scmp.lt.s32.totalorder %s22, 1
        %s221 = scalar_select %p220, %s22, 1
        %p222 = scmp.lt.s32.totalorder %s24, 0
        %s223 = scalar_select %p222, %s24, 0
        %p224 = scmp.lt.s32.totalorder %s219, 1
        %s225 = scalar_select %p224, %s219, 1
        %s226 = smul.addr %s223, 2
        %s227 = sadd.s32 %s225, %s226
        %s228 = smul.addr %s221, 2
        %s229 = sadd.s32 %s227, %s228
        %s230 = smul.addr %s229, 4
        %s231 = scalar_lea.vmem %s0, %s230
        %s232 = smul.u32 2, %s23
        %p233 = scmp.lt.s32.totalorder %s24, 0
        %s234 = scalar_select %p233, %s24, 0
        %s235 = smul.addr %s234, 4
        %s236 = scalar_lea.vmem %s1, %s235
        %s237 = smul.u32 2, %s23
        %p239 = scmp.eq.s32.totalorder %s24, 0
        // Predicated region
        $region33: #{tpu_custom_call.1} parent=31 // pred_check
          %p240 = pneg %p239
        $region34: #{tpu_custom_call.1} parent=31 // pred_check_branch
          %242 = sbr.rel (%p240) target = $region36
        $region35: #{tpu_custom_call.1} parent=31 // pred_region
          %243 = vst [vmem:[#allocation2] sm:$0xff] 0.0
          %244 = vst [vmem:[#allocation2 + $0x8] sm:$0xff] 0.0
          %245 = vst [vmem:[#allocation2 + $0x10] sm:$0xff] 0.0
          %246 = vst [vmem:[#allocation2 + $0x18] sm:$0xff] 0.0
          %247 = vst [vmem:[#allocation2 + $0x20] sm:$0xff] 0.0
          %248 = vst [vmem:[#allocation2 + $0x28] sm:$0xff] 0.0
          %249 = vst [vmem:[#allocation2 + $0x30] sm:$0xff] 0.0
          %250 = vst [vmem:[#allocation2 + $0x38] sm:$0xff] 0.0
        $region36: #{tpu_custom_call.1} parent=31 // pred_fallthru
          _
        %v251 = vld [vmem:[%s231] sm:$0xff]
        %v253 = vcombine.high %v251, %v251
        %v255 = vpack.c.bf16 %v251, %v251
        %v256 = vpack.c.bf16 %v253, %v253
        %v257 = vld [vmem:[#allocation2] sm:$0xff]
        %v258 = vld [vmem:[#allocation2 + $0x8] sm:$0xff]
        %v259 = vld [vmem:[#allocation2 + $0x10] sm:$0xff]
        %v260 = vld [vmem:[#allocation2 + $0x18] sm:$0xff]
        %v261 = vld [vmem:[#allocation2 + $0x20] sm:$0xff]
        %v262 = vld [vmem:[#allocation2 + $0x28] sm:$0xff]
        %v263 = vld [vmem:[#allocation2 + $0x30] sm:$0xff]
        %v264 = vld [vmem:[#allocation2 + $0x38] sm:$0xff]
        %v265 = vld [vmem:[%s236] sm:$0xf]
        %v266 = vld [vmem:[%s236 + $0x4] sm:$0xf]
        %v267 = vld [vmem:[%s236 + $0x8] sm:$0xf]
        %v268 = vld [vmem:[%s236 + $0xc] sm:$0xf]
        %v273 = vunpack.c.l.b16 %v265
        %v274 = vunpack.c.l.b16 %v266
        %v275 = vunpack.c.l.b16 %v267
        %v276 = vunpack.c.l.b16 %v268
        %v277 = vpack.c.b16 %v274, %v273
        %v278 = vpack.c.b16 %v276, %v275
        %vm279 = vcmask 31744
        %v281 = vsel %vm279, %v277, 0
        %v284 = vsel %vm279, %v278, 0
        %vm286 = vcmask 1041408
        %v288 = vsel %vm286, %v255, 0
        %v291 = vsel %vm286, %v256, 0
        %293 = vmatprep.subr.bf16.mxu0 %v291
        %294 = vmatpush1.bf16.msra.mxu0 %v288
        %295 = vmatprep.subr.bf16.mxu0 0
        %296 = vmatpush1.bf16.msra.mxu0 0
        %297 = vmatprep.subr.bf16.mxu0 0
        %298 = vmatpush1.bf16.msra.mxu0 0
        %299 = vmatprep.subr.bf16.mxu0 0
        %300 = vmatpush1.bf16.msra.mxu0 0
        %301 = vmatprep.subr.bf16.mxu0 0
        %302 = vmatpush1.bf16.msra.mxu0 0
        %303 = vmatprep.subr.bf16.mxu0 0
        %304 = vmatpush1.bf16.msra.mxu0 0
        %305 = vmatprep.subr.bf16.mxu0 0
        %306 = vmatpush1.bf16.msra.mxu0 0
        %307 = vmatprep.subr.bf16.mxu0 0
        %308 = vmatpush1.bf16.msra.mxu0 0
        %309 = vmatprep.subr.bf16.mxu0 0
        %310 = vmatpush1.bf16.msra.mxu0 0
        %311 = vmatprep.subr.bf16.mxu0 0
        %312 = vmatpush1.bf16.msra.mxu0 0
        %313 = vmatprep.subr.bf16.mxu0 0
        %314 = vmatpush1.bf16.msra.mxu0 0
        %315 = vmatprep.subr.bf16.mxu0 0
        %316 = vmatpush1.bf16.msra.mxu0 0
        %317 = vmatprep.subr.bf16.mxu0 0
        %318 = vmatpush1.bf16.msra.mxu0 0
        %319 = vmatprep.subr.bf16.mxu0 0
        %320 = vmatpush1.bf16.msra.mxu0 0
        %321 = vmatprep.subr.bf16.mxu0 0
        %322 = vmatpush1.bf16.msra.mxu0 0
        %323 = vmatprep.subr.bf16.mxu0 0
        %324 = vmatpush1.bf16.msra.mxu0 0
        %325 = vmatprep.mubr.bf16.mxu0 0
        %326 = vmatmul.mubr.bf16.gmra.mrb[0].mxu0 %v281
        %v327 = vpop.f32.mrb[0].mxu0
        %v328 = vadd.f32 0.0, %v327
        %v329 = vpop.f32.mrb[0].mxu0
        %v330 = vadd.f32 0.0, %v329
        %v331 = vpop.f32.mrb[0].mxu0
        %v332 = vadd.f32 0.0, %v331
        %v333 = vpop.f32.mrb[0].mxu0
        %v334 = vadd.f32 0.0, %v333
        %335 = vmatprep.mubr.bf16.mxu0 0
        %336 = vmatmul.mubr.bf16.gmra.mrb[0].mxu0 %v284
        %v337 = vpop.f32.mrb[0].mxu0
        %v338 = vadd.f32 0.0, %v337
        %v339 = vpop.f32.mrb[0].mxu0
        %v340 = vadd.f32 0.0, %v339
        %v341 = vpop.f32.mrb[0].mxu0
        %v342 = vadd.f32 0.0, %v341
        %v343 = vpop.f32.mrb[0].mxu0
        %v344 = vadd.f32 0.0, %v343
        %345 = vdwg.mxu0
        %v346 = vadd.f32 %v257, %v328
        %v347 = vadd.f32 %v258, %v330
        %v348 = vadd.f32 %v259, %v332
        %v349 = vadd.f32 %v260, %v334
        %v350 = vadd.f32 %v261, %v338
        %v351 = vadd.f32 %v262, %v340
        %v352 = vadd.f32 %v263, %v342
        %v353 = vadd.f32 %v264, %v344
        %354 = vst [vmem:[#allocation2] sm:$0xff] %v346
        %355 = vst [vmem:[#allocation2 + $0x8] sm:$0xff] %v347
        %356 = vst [vmem:[#allocation2 + $0x10] sm:$0xff] %v348
        %357 = vst [vmem:[#allocation2 + $0x18] sm:$0xff] %v349
        %358 = vst [vmem:[#allocation2 + $0x20] sm:$0xff] %v350
        %359 = vst [vmem:[#allocation2 + $0x28] sm:$0xff] %v351
        %360 = vst [vmem:[#allocation2 + $0x30] sm:$0xff] %v352
        %361 = vst [vmem:[#allocation2 + $0x38] sm:$0xff] %v353
        // Predicated region
        $region37: #{tpu_custom_call.1} parent=31 // pred_check
          %p362 = pneg %p239
        $region38: #{tpu_custom_call.1} parent=31 // pred_check_branch
          %364 = sbr.rel (%p362) target = $region40
        $region39: #{tpu_custom_call.1} parent=31 // pred_region
          %v365 = vld [vmem:[#allocation2] sm:$0xff]
          %v366 = vld [vmem:[#allocation2 + $0x8] sm:$0xff]
          %v367 = vld [vmem:[#allocation2 + $0x10] sm:$0xff]
          %v368 = vld [vmem:[#allocation2 + $0x18] sm:$0xff]
          %v369 = vld [vmem:[#allocation2 + $0x20] sm:$0xff]
          %v370 = vld [vmem:[#allocation2 + $0x28] sm:$0xff]
          %v371 = vld [vmem:[#allocation2 + $0x30] sm:$0xff]
          %v372 = vld [vmem:[#allocation2 + $0x38] sm:$0xff]
          %v373 = vld [vmem:[%s2] sm:$0xff]
          %v374 = vld [vmem:[%s2 + $0x8] sm:$0xff]
          %v375 = vld [vmem:[%s2 + $0x10] sm:$0xff]
          %v376 = vld [vmem:[%s2 + $0x18] sm:$0xff]
          %378 = vset.pattern.permute.xlu0 0
          %379 = vperm.xlu0 %378, %v373
          %v380 = vpop.permute.xlu0 %379
          %383 = vset.pattern.permute.xlu0 0
          %384 = vperm.xlu0 %383, %v374
          %v385 = vpop.permute.xlu0 %384
          %388 = vset.pattern.permute.xlu0 0
          %389 = vperm.xlu0 %388, %v375
          %v390 = vpop.permute.xlu0 %389
          %393 = vset.pattern.permute.xlu0 0
          %394 = vperm.xlu0 %393, %v376
          %v395 = vpop.permute.xlu0 %394
          %v397 = vadd.f32 %v365, %v380
          %v398 = vadd.f32 %v366, %v380
          %v399 = vadd.f32 %v367, %v385
          %v400 = vadd.f32 %v368, %v385
          %v401 = vadd.f32 %v369, %v390
          %v402 = vadd.f32 %v370, %v390
          %v403 = vadd.f32 %v371, %v395
          %v404 = vadd.f32 %v372, %v395
          %v405 = vmax.f32 %v397, 0.0
          %v406 = vmax.f32 %v398, 0.0
          %v407 = vmax.f32 %v399, 0.0
          %v408 = vmax.f32 %v400, 0.0
          %v409 = vmax.f32 %v401, 0.0
          %v410 = vmax.f32 %v402, 0.0
          %v411 = vmax.f32 %v403, 0.0
          %v412 = vmax.f32 %v404, 0.0
          %413 = vst [vmem:[%s218] sm:$0xff] %v405
          %414 = vst [vmem:[%s218 + $0x8] sm:$0xff] %v406
          %415 = vst [vmem:[%s218 + $0x10] sm:$0xff] %v407
          %416 = vst [vmem:[%s218 + $0x18] sm:$0xff] %v408
          %417 = vst [vmem:[%s218 + $0x20] sm:$0xff] %v409
          %418 = vst [vmem:[%s218 + $0x28] sm:$0xff] %v410
          %419 = vst [vmem:[%s218 + $0x30] sm:$0xff] %v411
          %420 = vst [vmem:[%s218 + $0x38] sm:$0xff] %v412
        $region40: #{tpu_custom_call.1} parent=31 // pred_fallthru
          _
        %s421 = sand.u32 %s123, 1
        %s422 = scalar_lea.sflag [#allocation4], %s421
        %s423 = sand.u32 %s123, 1
        %s424 = smul.addr %s423, 64
        %s425 = scalar_lea.vmem [#allocation3], %s424
        // Predicated region
        $region41: #{tpu_custom_call.1} parent=31 // pred_check
          %p426 = pneg %p133
        $region42: #{tpu_custom_call.1} parent=31 // pred_check_branch
          %428 = sbr.rel (%p426) target = $region44
        $region43: #{tpu_custom_call.1} parent=31 // pred_region
          %s429 = smul.u32 2, %s23
          %s431 = ssub.s32 1024, 1024
          %432 = vsyncadd %s422, %s431
          %s433 = smul.addr %s22, 8
          %s434 = sadd.s32 %s429, %s433
          %s435 = smul.addr %s434, 128
          %s436 = scalar_lea.hbm %s3, %s435
          %s437 = sshll.u32 %s425, 4
          %s438 = int_to_ptr.vmem [resolvable:$true] %s437
          %443 = dma.vmem_to_hbm [thread:$0]  %s438, 1024, %s436, %s422, 256, 256, 16
        $region44: #{tpu_custom_call.1} parent=31 // pred_fallthru
          _
      $region32: #{tpu_custom_call.1} parent=5 // pred_fallthru
        _
      %p444 = scmp.le.s32.totalorder 2, %s12
      // Predicated region
      $region45: #{tpu_custom_call.1} parent=5 // pred_check
        %p445 = pneg %p444
      $region46: #{tpu_custom_call.1} parent=5 // pred_check_branch
        %447 = sbr.rel (%p445) target = $region48
      $region47: #{tpu_custom_call.1} parent=5 // pred_region
        %s448 = ssub.s32 %s12, 2
        // Predicated region
        $region49: #{tpu_custom_call.1} parent=47 // pred_check
          %p449 = pneg %p139
        $region50: #{tpu_custom_call.1} parent=47 // pred_check_branch
          %451 = sbr.rel (%p449) target = $region52
        $region51: #{tpu_custom_call.1} parent=47 // pred_region
          %s452 = sand.u32 %s124, 1
          %s453 = scalar_lea.sflag [#allocation4], %s452
          %s454 = sand.u32 %s124, 1
          %s455 = smul.addr %s454, 64
          %s456 = scalar_lea.vmem [#allocation3], %s455
          %457 = dma.done %s453, 1024
        $region52: #{tpu_custom_call.1} parent=47 // pred_fallthru
          _
      $region48: #{tpu_custom_call.1} parent=5 // pred_fallthru
        _
    $region6: #{tpu_custom_call.1} parent=1 // loop_footer
      %s16 = sadd.s32 1, %s12
    $region7: #{tpu_custom_call.1} parent=1 // loop_footer_branch
      %11 = sbr.rel target = $region3
    $region8: #{tpu_custom_call.1} parent=1 // loop_exit
      _
    %458 = vsyncpa [#allocation4], 1
    %s459 = scalar_lea.sflag [#allocation4], 1
    %460 = vsyncpa %s459, 1

// kernel: tpu_custom_call.1
$region0: #{tpu_custom_call.1}
  #allocation0 [shape = 'u32[]', space=smem, size = 0x4, offset = 0x4, fixed_abs, tag = 'smem constant byte address 0x4 - core index']
  #allocation1 [shape = 'u32[144,128]{1,0:T(1,128)}', space=vmem, size = 0x12000, scoped, tag = 'internal scratch']
  #allocation2 [shape = 'f32[32,256]{1,0:T(8,128)}', space=vmem, size = 0x8000, scoped, tag = 'scratch operand']
  %s0 = inlined_call_operand.vmem [shape: f32[2,4,256], index: 0, kind: input, shape index: {}]
  %s1 = inlined_call_operand.vmem [shape: bf16[32,4], index: 1, kind: input, shape index: {}]
  %s2 = inlined_call_operand.vmem [shape: f32[32,1], index: 2, kind: input, shape index: {}]
  %s3 = inlined_call_operand.hbm [shape: f32[2,32,256], index: 3, kind: output, shape index: {}]
  %s4 = sld [smem:[#allocation0]]
  $region53: #{tpu_custom_call.1} parent=0
    _
  %s6 = ssub.s32 1, %s4
  %s7 = scalar_select 0, %s6, %s4
  $region1: #{tpu_custom_call.1} parent=0
    #allocation3 [shape = 'u8[65536]{0}', space=vmem, size = 0x10000, scoped, tag = 'output window, operand 0']
    #allocation4 [shape = 's32[2]{0}', space=sflag, size = 0x8, scoped, tag = 'scoped memory for tpu_custom_call.1']
    %8 = vsyncpa [#allocation4], 0
    %s9 = scalar_lea.sflag [#allocation4], 1
    %10 = vsyncpa %s9, 0
    loop: start=0, step=1, limit=4
    $region2: #{tpu_custom_call.1} parent=1 // loop_pre_header
      _
    $region3: #{tpu_custom_call.1} parent=1 // loop_header
      %s12 = sphi 0, %s16
      %p13 = scmp.ge.s32.totalorder %s12, 4
      %s19 = sphi 0, %s38
      %s20 = sphi 0, %s34
      %s21 = sphi 0, %s30
      %s22 = sphi 0, %s19
      %s23 = sphi 0, %s20
      %s24 = sphi 0, %s21
      %s25 = sphi 0, %s22
      %s26 = sphi 0, %s23
      %s27 = sphi 0, %s24
      %s45 = sphi 0, %s47
      %s48 = sphi 0, %s45
      %s49 = sphi 0, %s48
      %s65 = sphi 0, %s49
      %s71 = sphi 0, %s73
      %s74 = sphi 0, %s71
      %s75 = sphi 0, %s74
      %s91 = sphi 0, %s75
      %s95 = sphi 0, %s95
      %s97 = sphi 0, %s95
      %s98 = sphi 0, %s97
      %s112 = sphi 0, %s98
      %s120 = sphi 0, %s122
      %s123 = sphi 0, %s120
      %s124 = sphi 0, %s123
      %s140 = sphi 0, %s124
    $region4: #{tpu_custom_call.1} parent=1 // loop_header_branch
      %15 = sbr.rel (%p13) target = $region8
    $region5: #{tpu_custom_call.1} parent=1 // loop_body
      %s17 = ssub.s32 %s12, 1
      %s18 = ssub.s32 %s12, 2
      %s28 = sadd.s32 1, %s21
      %p29 = scmp.ge.s32.totalorder %s28, 1
      %s30 = scalar_select %p29, 0, %s28
      %s31 = sadd.s32 1, %s20
      %s32 = scalar_select %p29, %s31, %s20
      %p33 = scmp.ge.s32.totalorder %s32, 1
      %s34 = scalar_select %p33, 0, %s32
      %s35 = sadd.s32 1, %s19
      %s36 = scalar_select %p33, %s35, %s19
      %p37 = scmp.ge.s32.totalorder %s36, 2
      %s38 = scalar_select %p37, 0, %s36
      %s39 = ssub.s32 %s19, %s38
      %s40 = ssub.s32 %s21, %s30
      %s41 = sor.u32 %s39, %s40
      %s42 = ssub.s32 %s20, %s34
      %s43 = sor.u32 %s41, %s42
      %p44 = scmp.eq.s32.totalorder %s43, 0
      %s46 = sadd.s32 %s45, 1
      %s47 = scalar_select %p44, %s45, %s46
      %p50 = pneg %p44
      %p51 = scmp.eq.s32.totalorder %s12, 1
      %p52 = por %p50, %p51
      %p53 = scmp.ne.s32.totalorder %s45, %s48
      %p54 = scmp.eq.s32.totalorder %s12, 0
      %p55 = por %p53, %p54
      %p56 = scmp.ne.s32.totalorder %s45, %s48
      %p57 = scmp.eq.s32.totalorder %s17, 1
      %p58 = por %p56, %p57
      %p59 = scmp.ne.s32.totalorder %s48, %s49
      %p60 = scmp.eq.s32.totalorder %s17, 0
      %p61 = por %p59, %p60
      %p62 = scmp.ne.s32.totalorder %s48, %s49
      %p63 = scmp.eq.s32.totalorder %s18, 1
      %p64 = por %p62, %p63
      %p66 = scmp.ne.s32.totalorder %s49, %s65
      %p67 = scmp.eq.s32.totalorder %s18, 0
      %p68 = por %p66, %p67
      %s69 = ssub.s32 %s21, %s30
      %p70 = scmp.eq.s32.totalorder %s69, 0
      %s72 = sadd.s32 %s71, 1
      %s73 = scalar_select %p70, %s71, %s72
      %p76 = pneg %p70
      %p77 = scmp.eq.s32.totalorder %s12, 1
      %p78 = por %p76, %p77
      %p79 = scmp.ne.s32.totalorder %s71, %s74
      %p80 = scmp.eq.s32.totalorder %s12, 0
      %p81 = por %p79, %p80
      %p82 = scmp.ne.s32.totalorder %s71, %s74
      %p83 = scmp.eq.s32.totalorder %s17, 1
      %p84 = por %p82, %p83
      %p85 = scmp.ne.s32.totalorder %s74, %s75
      %p86 = scmp.eq.s32.totalorder %s17, 0
      %p87 = por %p85, %p86
      %p88 = scmp.ne.s32.totalorder %s74, %s75
      %p89 = scmp.eq.s32.totalorder %s18, 1
      %p90 = por %p88, %p89
      %p92 = scmp.ne.s32.totalorder %s75, %s91
      %p93 = scmp.eq.s32.totalorder %s18, 0
      %p94 = por %p92, %p93
      %s96 = sadd.s32 %s95, 1
      %p99 = scmp.eq.s32.totalorder %s12, 1
      %p100 = scmp.ne.s32.totalorder %s95, %s97
      %p101 = scmp.eq.s32.totalorder %s12, 0
      %p102 = por %p100, %p101
      %p103 = scmp.ne.s32.totalorder %s95, %s97
      %p104 = scmp.eq.s32.totalorder %s17, 1
      %p105 = por %p103, %p104
      %p106 = scmp.ne.s32.totalorder %s97, %s98
      %p107 = scmp.eq.s32.totalorder %s17, 0
      %p108 = por %p106, %p107
      %p109 = scmp.ne.s32.totalorder %s97, %s98
      %p110 = scmp.eq.s32.totalorder %s18, 1
      %p111 = por %p109, %p110
      %p113 = scmp.ne.s32.totalorder %s98, %s112
      %p114 = scmp.eq.s32.totalorder %s18, 0
      %p115 = por %p113, %p114
      %s116 = ssub.s32 %s19, %s38
      %s117 = ssub.s32 %s20, %s34
      %s118 = sor.u32 %s116, %s117
      %p119 = scmp.eq.s32.totalorder %s118, 0
      %s121 = sadd.s32 %s120, 1
      %s122 = scalar_select %p119, %s120, %s121
      %p125 = pneg %p119
      %p126 = scmp.eq.s32.totalorder %s12, 1
      %p127 = por %p125, %p126
      %p128 = scmp.ne.s32.totalorder %s120, %s123
      %p129 = scmp.eq.s32.totalorder %s12, 0
      %p130 = por %p128, %p129
      %p131 = scmp.ne.s32.totalorder %s120, %s123
      %p132 = scmp.eq.s32.totalorder %s17, 1
      %p133 = por %p131, %p132
      %p134 = scmp.ne.s32.totalorder %s123, %s124
      %p135 = scmp.eq.s32.totalorder %s17, 0
      %p136 = por %p134, %p135
      %p137 = scmp.ne.s32.totalorder %s123, %s124
      %p138 = scmp.eq.s32.totalorder %s18, 1
      %p139 = por %p137, %p138
      %p141 = scmp.ne.s32.totalorder %s124, %s140
      %p142 = scmp.eq.s32.totalorder %s18, 0
      %p143 = por %p141, %p142
      %p144 = scmp.le.s32.totalorder 1, %s12
      %p145 = scmp.lt.s32.totalorder %s12, 3
      %p146 = pnand %p144, %p145
      %p147 = pneg %p146
      // Predicated region
      $region9: #{tpu_custom_call.1} parent=5 // pred_check
        _
      $region10: #{tpu_custom_call.1} parent=5 // pred_check_branch
        %149 = sbr.rel (%p146) target = $region12
      $region11: #{tpu_custom_call.1} parent=5 // pred_region
        %s150 = ssub.s32 %s12, 1
        // Predicated region
        $region13: #{tpu_custom_call.1} parent=11 // pred_check
          %p151 = pneg %p87
        $region14: #{tpu_custom_call.1} parent=11 // pred_check_branch
          %153 = sbr.rel (%p151) target = $region16
        $region15: #{tpu_custom_call.1} parent=11 // pred_region
          %p154 = scmp.lt.s32.totalorder %s24, 0
          %s155 = scalar_select %p154, %s24, 0
          %s156 = smul.addr %s155, 4
          %s157 = scalar_lea.vmem %s1, %s156
        $region16: #{tpu_custom_call.1} parent=11 // pred_fallthru
          _
        // Predicated region
        $region17: #{tpu_custom_call.1} parent=11 // pred_check
          %p158 = pneg %p108
        $region18: #{tpu_custom_call.1} parent=11 // pred_check_branch
          %160 = sbr.rel (%p158) target = $region20
        $region19: #{tpu_custom_call.1} parent=11 // pred_region
          _
        $region20: #{tpu_custom_call.1} parent=11 // pred_fallthru
          _
      $region12: #{tpu_custom_call.1} parent=5 // pred_fallthru
        _
      %p161 = scmp.lt.s32.totalorder %s12, 2
      // Predicated region
      $region21: #{tpu_custom_call.1} parent=5 // pred_check
        %p162 = pneg %p161
      $region22: #{tpu_custom_call.1} parent=5 // pred_check_branch
        %164 = sbr.rel (%p162) target = $region24
      $region23: #{tpu_custom_call.1} parent=5 // pred_region
        // Predicated region
        $region25: #{tpu_custom_call.1} parent=23 // pred_check
          %p165 = pneg %p55
        $region26: #{tpu_custom_call.1} parent=23 // pred_check_branch
          %167 = sbr.rel (%p165) target = $region28
        $region27: #{tpu_custom_call.1} parent=23 // pred_region
          %s168 = smul.u32 2, %s20
          %p169 = scmp.lt.s32.totalorder %s19, 1
          %s170 = scalar_select %p169, %s19, 1
          %p171 = scmp.lt.s32.totalorder %s21, 0
          %s172 = scalar_select %p171, %s21, 0
          %p173 = scmp.lt.s32.totalorder %s168, 1
          %s174 = scalar_select %p173, %s168, 1
          %s175 = smul.addr %s172, 2
          %s176 = sadd.s32 %s174, %s175
          %s177 = smul.addr %s170, 2
          %s178 = sadd.s32 %s176, %s177
          %s179 = smul.addr %s178, 4
          %s180 = scalar_lea.vmem %s0, %s179
          %s181 = smul.u32 2, %s20
        $region28: #{tpu_custom_call.1} parent=23 // pred_fallthru
          _
      $region24: #{tpu_custom_call.1} parent=5 // pred_fallthru
        _
      %p182 = scmp.le.s32.totalorder 1, %s12
      %p183 = scmp.lt.s32.totalorder %s12, 3
      %p184 = pnand %p182, %p183
      %p185 = pneg %p184
      // Predicated region
      $region29: #{tpu_custom_call.1} parent=5 // pred_check
        _
      $region30: #{tpu_custom_call.1} parent=5 // pred_check_branch
        %187 = sbr.rel (%p184) target = $region32
      $region31: #{tpu_custom_call.1} parent=5 // pred_region
        %s188 = ssub.s32 %s12, 1
        %s189 = smul.u32 2, %s23
        %p190 = scmp.lt.s32.totalorder %s22, 1
        %s191 = scalar_select %p190, %s22, 1
        %p192 = scmp.lt.s32.totalorder %s24, 0
        %s193 = scalar_select %p192, %s24, 0
        %p194 = scmp.lt.s32.totalorder %s189, 1
        %s195 = scalar_select %p194, %s189, 1
        %s196 = smul.addr %s193, 2
        %s197 = sadd.s32 %s195, %s196
        %s198 = smul.addr %s191, 2
        %s199 = sadd.s32 %s197, %s198
        %s200 = smul.addr %s199, 4
        %s201 = scalar_lea.vmem %s0, %s200
        %p202 = pneg %p61
        %p203 = pneg %p58
        %p204 = scmp.lt.s32.totalorder %s24, 0
        %s205 = scalar_select %p204, %s24, 0
        %s206 = smul.addr %s205, 4
        %s207 = scalar_lea.vmem %s1, %s206
        %p208 = pneg %p87
        %p209 = pneg %p84
        %p210 = pneg %p108
        %p211 = pneg %p105
        %p212 = pneg %p136
        %p213 = pneg %p133
        %s214 = sand.u32 %s123, 1
        %s215 = scalar_lea.sflag [#allocation4], %s214
        %s216 = sand.u32 %s123, 1
        %s217 = smul.addr %s216, 64
        %s218 = scalar_lea.vmem [#allocation3], %s217
        %s219 = smul.u32 2, %s23
        %p220 = scmp.lt.s32.totalorder %s22, 1
        %s221 = scalar_select %p220, %s22, 1
        %p222 = scmp.lt.s32.totalorder %s24, 0
        %s223 = scalar_select %p222, %s24, 0
        %p224 = scmp.lt.s32.totalorder %s219, 1
        %s225 = scalar_select %p224, %s219, 1
        %s226 = smul.addr %s223, 2
        %s227 = sadd.s32 %s225, %s226
        %s228 = smul.addr %s221, 2
        %s229 = sadd.s32 %s227, %s228
        %s230 = smul.addr %s229, 4
        %s231 = scalar_lea.vmem %s0, %s230
        %s232 = smul.u32 2, %s23
        %p233 = scmp.lt.s32.totalorder %s24, 0
        %s234 = scalar_select %p233, %s24, 0
        %s235 = smul.addr %s234, 4
        %s236 = scalar_lea.vmem %s1, %s235
        %s237 = smul.u32 2, %s23
        %p239 = scmp.eq.s32.totalorder %s24, 0
        // Predicated region
        $region33: #{tpu_custom_call.1} parent=31 // pred_check
          %p240 = pneg %p239
        $region34: #{tpu_custom_call.1} parent=31 // pred_check_branch
          %242 = sbr.rel (%p240) target = $region36
        $region35: #{tpu_custom_call.1} parent=31 // pred_region
          %243 = vst [vmem:[#allocation2] sm:$0xff] 0.0
          %244 = vst [vmem:[#allocation2 + $0x8] sm:$0xff] 0.0
          %245 = vst [vmem:[#allocation2 + $0x10] sm:$0xff] 0.0
          %246 = vst [vmem:[#allocation2 + $0x18] sm:$0xff] 0.0
          %247 = vst [vmem:[#allocation2 + $0x20] sm:$0xff] 0.0
          %248 = vst [vmem:[#allocation2 + $0x28] sm:$0xff] 0.0
          %249 = vst [vmem:[#allocation2 + $0x30] sm:$0xff] 0.0
          %250 = vst [vmem:[#allocation2 + $0x38] sm:$0xff] 0.0
        $region36: #{tpu_custom_call.1} parent=31 // pred_fallthru
          _
        %v251 = vld [vmem:[%s231] sm:$0xff]
        %v253 = vcombine.high %v251, %v251
        %v255 = vpack.c.bf16 %v251, %v251
        %v256 = vpack.c.bf16 %v253, %v253
        %v257 = vld [vmem:[#allocation2] sm:$0xff]
        %v258 = vld [vmem:[#allocation2 + $0x8] sm:$0xff]
        %v259 = vld [vmem:[#allocation2 + $0x10] sm:$0xff]
        %v260 = vld [vmem:[#allocation2 + $0x18] sm:$0xff]
        %v261 = vld [vmem:[#allocation2 + $0x20] sm:$0xff]
        %v262 = vld [vmem:[#allocation2 + $0x28] sm:$0xff]
        %v263 = vld [vmem:[#allocation2 + $0x30] sm:$0xff]
        %v264 = vld [vmem:[#allocation2 + $0x38] sm:$0xff]
        %v265 = vld [vmem:[%s236] sm:$0xf]
        %v266 = vld [vmem:[%s236 + $0x4] sm:$0xf]
        %v267 = vld [vmem:[%s236 + $0x8] sm:$0xf]
        %v268 = vld [vmem:[%s236 + $0xc] sm:$0xf]
        %v273 = vunpack.c.l.b16 %v265
        %v274 = vunpack.c.l.b16 %v266
        %v275 = vunpack.c.l.b16 %v267
        %v276 = vunpack.c.l.b16 %v268
        %v277 = vpack.c.b16 %v274, %v273
        %v278 = vpack.c.b16 %v276, %v275
        %vm279 = vcmask 31744
        %v281 = vsel %vm279, %v277, 0
        %v284 = vsel %vm279, %v278, 0
        %vm286 = vcmask 1041408
        %v288 = vsel %vm286, %v255, 0
        %v291 = vsel %vm286, %v256, 0
        %293 = vmatprep.subr.bf16.mxu0 %v291
        %294 = vmatpush1.bf16.msra.mxu0 %v288
        %295 = vmatprep.subr.bf16.mxu0 0
        %296 = vmatpush1.bf16.msra.mxu0 0
        %297 = vmatprep.subr.bf16.mxu0 0
        %298 = vmatpush1.bf16.msra.mxu0 0
        %299 = vmatprep.subr.bf16.mxu0 0
        %300 = vmatpush1.bf16.msra.mxu0 0
        %301 = vmatprep.subr.bf16.mxu0 0
        %302 = vmatpush1.bf16.msra.mxu0 0
        %303 = vmatprep.subr.bf16.mxu0 0
        %304 = vmatpush1.bf16.msra.mxu0 0
        %305 = vmatprep.subr.bf16.mxu0 0
        %306 = vmatpush1.bf16.msra.mxu0 0
        %307 = vmatprep.subr.bf16.mxu0 0
        %308 = vmatpush1.bf16.msra.mxu0 0
        %309 = vmatprep.subr.bf16.mxu0 0
        %310 = vmatpush1.bf16.msra.mxu0 0
        %311 = vmatprep.subr.bf16.mxu0 0
        %312 = vmatpush1.bf16.msra.mxu0 0
        %313 = vmatprep.subr.bf16.mxu0 0
        %314 = vmatpush1.bf16.msra.mxu0 0
        %315 = vmatprep.subr.bf16.mxu0 0
        %316 = vmatpush1.bf16.msra.mxu0 0
        %317 = vmatprep.subr.bf16.mxu0 0
        %318 = vmatpush1.bf16.msra.mxu0 0
        %319 = vmatprep.subr.bf16.mxu0 0
        %320 = vmatpush1.bf16.msra.mxu0 0
        %321 = vmatprep.subr.bf16.mxu0 0
        %322 = vmatpush1.bf16.msra.mxu0 0
        %323 = vmatprep.subr.bf16.mxu0 0
        %324 = vmatpush1.bf16.msra.mxu0 0
        %325 = vmatprep.mubr.bf16.mxu0 0
        %326 = vmatmul.mubr.bf16.gmra.mrb[0].mxu0 %v281
        %v327 = vpop.f32.mrb[0].mxu0
        %v328 = vadd.f32 0.0, %v327
        %v329 = vpop.f32.mrb[0].mxu0
        %v330 = vadd.f32 0.0, %v329
        %v331 = vpop.f32.mrb[0].mxu0
        %v332 = vadd.f32 0.0, %v331
        %v333 = vpop.f32.mrb[0].mxu0
        %v334 = vadd.f32 0.0, %v333
        %335 = vmatprep.mubr.bf16.mxu0 0
        %336 = vmatmul.mubr.bf16.gmra.mrb[0].mxu0 %v284
        %v337 = vpop.f32.mrb[0].mxu0
        %v338 = vadd.f32 0.0, %v337
        %v339 = vpop.f32.mrb[0].mxu0
        %v340 = vadd.f32 0.0, %v339
        %v341 = vpop.f32.mrb[0].mxu0
        %v342 = vadd.f32 0.0, %v341
        %v343 = vpop.f32.mrb[0].mxu0
        %v344 = vadd.f32 0.0, %v343
        %345 = vdwg.mxu0
        %v346 = vadd.f32 %v257, %v328
        %v347 = vadd.f32 %v258, %v330
        %v348 = vadd.f32 %v259, %v332
        %v349 = vadd.f32 %v260, %v334
        %v350 = vadd.f32 %v261, %v338
        %v351 = vadd.f32 %v262, %v340
        %v352 = vadd.f32 %v263, %v342
        %v353 = vadd.f32 %v264, %v344
        %354 = vst [vmem:[#allocation2] sm:$0xff] %v346
        %355 = vst [vmem:[#allocation2 + $0x8] sm:$0xff] %v347
        %356 = vst [vmem:[#allocation2 + $0x10] sm:$0xff] %v348
        %357 = vst [vmem:[#allocation2 + $0x18] sm:$0xff] %v349
        %358 = vst [vmem:[#allocation2 + $0x20] sm:$0xff] %v350
        %359 = vst [vmem:[#allocation2 + $0x28] sm:$0xff] %v351
        %360 = vst [vmem:[#allocation2 + $0x30] sm:$0xff] %v352
        %361 = vst [vmem:[#allocation2 + $0x38] sm:$0xff] %v353
        // Predicated region
        $region37: #{tpu_custom_call.1} parent=31 // pred_check
          %p362 = pneg %p239
        $region38: #{tpu_custom_call.1} parent=31 // pred_check_branch
          %364 = sbr.rel (%p362) target = $region40
        $region39: #{tpu_custom_call.1} parent=31 // pred_region
          %v365 = vld [vmem:[#allocation2] sm:$0xff]
          %v366 = vld [vmem:[#allocation2 + $0x8] sm:$0xff]
          %v367 = vld [vmem:[#allocation2 + $0x10] sm:$0xff]
          %v368 = vld [vmem:[#allocation2 + $0x18] sm:$0xff]
          %v369 = vld [vmem:[#allocation2 + $0x20] sm:$0xff]
          %v370 = vld [vmem:[#allocation2 + $0x28] sm:$0xff]
          %v371 = vld [vmem:[#allocation2 + $0x30] sm:$0xff]
          %v372 = vld [vmem:[#allocation2 + $0x38] sm:$0xff]
          %v373 = vld [vmem:[%s2] sm:$0xff]
          %v374 = vld [vmem:[%s2 + $0x8] sm:$0xff]
          %v375 = vld [vmem:[%s2 + $0x10] sm:$0xff]
          %v376 = vld [vmem:[%s2 + $0x18] sm:$0xff]
          %378 = vset.pattern.permute.xlu0 0
          %379 = vperm.xlu0 %378, %v373
          %v380 = vpop.permute.xlu0 %379
          %383 = vset.pattern.permute.xlu0 0
          %384 = vperm.xlu0 %383, %v374
          %v385 = vpop.permute.xlu0 %384
          %388 = vset.pattern.permute.xlu0 0
          %389 = vperm.xlu0 %388, %v375
          %v390 = vpop.permute.xlu0 %389
          %393 = vset.pattern.permute.xlu0 0
          %394 = vperm.xlu0 %393, %v376
          %v395 = vpop.permute.xlu0 %394
          %v397 = vadd.f32 %v365, %v380
          %v398 = vadd.f32 %v366, %v380
          %v399 = vadd.f32 %v367, %v385
          %v400 = vadd.f32 %v368, %v385
          %v401 = vadd.f32 %v369, %v390
          %v402 = vadd.f32 %v370, %v390
          %v403 = vadd.f32 %v371, %v395
          %v404 = vadd.f32 %v372, %v395
          %v405 = vmax.f32 %v397, 0.0
          %v406 = vmax.f32 %v398, 0.0
          %v407 = vmax.f32 %v399, 0.0
          %v408 = vmax.f32 %v400, 0.0
          %v409 = vmax.f32 %v401, 0.0
          %v410 = vmax.f32 %v402, 0.0
          %v411 = vmax.f32 %v403, 0.0
          %v412 = vmax.f32 %v404, 0.0
          %413 = vst [vmem:[%s218] sm:$0xff] %v405
          %414 = vst [vmem:[%s218 + $0x8] sm:$0xff] %v406
          %415 = vst [vmem:[%s218 + $0x10] sm:$0xff] %v407
          %416 = vst [vmem:[%s218 + $0x18] sm:$0xff] %v408
          %417 = vst [vmem:[%s218 + $0x20] sm:$0xff] %v409
          %418 = vst [vmem:[%s218 + $0x28] sm:$0xff] %v410
          %419 = vst [vmem:[%s218 + $0x30] sm:$0xff] %v411
          %420 = vst [vmem:[%s218 + $0x38] sm:$0xff] %v412
        $region40: #{tpu_custom_call.1} parent=31 // pred_fallthru
          _
        %s421 = sand.u32 %s123, 1
        %s422 = scalar_lea.sflag [#allocation4], %s421
        %s423 = sand.u32 %s123, 1
        %s424 = smul.addr %s423, 64
        %s425 = scalar_lea.vmem [#allocation3], %s424
        // Predicated region
        $region41: #{tpu_custom_call.1} parent=31 // pred_check
          %p426 = pneg %p133
        $region42: #{tpu_custom_call.1} parent=31 // pred_check_branch
          %428 = sbr.rel (%p426) target = $region44
        $region43: #{tpu_custom_call.1} parent=31 // pred_region
          %s429 = smul.u32 2, %s23
          %s431 = ssub.s32 1024, 1024
          %432 = vsyncadd %s422, %s431
          %s433 = smul.addr %s22, 8
          %s434 = sadd.s32 %s429, %s433
          %s435 = smul.addr %s434, 128
          %s436 = scalar_lea.hbm %s3, %s435
          %s437 = sshll.u32 %s425, 4
          %s438 = int_to_ptr.vmem [resolvable:$true] %s437
          %443 = dma.vmem_to_hbm [thread:$0]  %s438, 1024, %s436, %s422, 256, 256, 16
        $region44: #{tpu_custom_call.1} parent=31 // pred_fallthru
          _
      $region32: #{tpu_custom_call.1} parent=5 // pred_fallthru
        _
      %p444 = scmp.le.s32.totalorder 2, %s12
      // Predicated region
      $region45: #{tpu_custom_call.1} parent=5 // pred_check
        %p445 = pneg %p444
      $region46: #{tpu_custom_call.1} parent=5 // pred_check_branch
        %447 = sbr.rel (%p445) target = $region48
      $region47: #{tpu_custom_call.1} parent=5 // pred_region
        %s448 = ssub.s32 %s12, 2
        // Predicated region
        $region49: #{tpu_custom_call.1} parent=47 // pred_check
          %p449 = pneg %p139
        $region50: #{tpu_custom_call.1} parent=47 // pred_check_branch
          %451 = sbr.rel (%p449) target = $region52
        $region51: #{tpu_custom_call.1} parent=47 // pred_region
          %s452 = sand.u32 %s124, 1
          %s453 = scalar_lea.sflag [#allocation4], %s452
          %s454 = sand.u32 %s124, 1
          %s455 = smul.addr %s454, 64
          %s456 = scalar_lea.vmem [#allocation3], %s455
          %457 = dma.done %s453, 1024
        $region52: #{tpu_custom_call.1} parent=47 // pred_fallthru
          _
      $region48: #{tpu_custom_call.1} parent=5 // pred_fallthru
        _
    $region6: #{tpu_custom_call.1} parent=1 // loop_footer
      %s16 = sadd.s32 1, %s12
    $region7: #{tpu_custom_call.1} parent=1 // loop_footer_branch
      %11 = sbr.rel target = $region3
    $region8: #{tpu_custom_call.1} parent=1 // loop_exit
      _
    %458 = vsyncpa [#allocation4], 1
    %s459 = scalar_lea.sflag [#allocation4], 1
    %460 = vsyncpa %s459, 1

</llo_original>
